<compile_context>
chip_gen: v7x
topology: tpu7x:2x2x1
jax: 0.10.0
libtpu: 0.0.40
codegen_flags: <defaults>
</compile_context>

<pallas_src>
import math

import jax
import jax.numpy as jnp
from jax.experimental import pallas as pl
from jax.experimental.pallas import tpu as pltpu


# ------------------------------ Pallas kernels -------------------------------

def _ffn_kernel_resident(x_ref, w1_ref, b1_ref, w2_ref, b2_ref, o_ref):
    # 1-D grid over row tiles; w1/w2/b1/b2 are VMEM-resident (constant blocks).
    h = jnp.dot(x_ref[...], w1_ref[...],
                preferred_element_type=jnp.float32) + b1_ref[...]
    h = jax.nn.gelu(h, approximate=True)          # tanh GELU -> EUP
    o_ref[...] = (jnp.dot(h.astype(jnp.bfloat16), w2_ref[...],
                          preferred_element_type=jnp.float32)
                  + b2_ref[...]).astype(o_ref.dtype)


def _ffn_kernel_tiled(x_ref, w1_ref, b1_ref, w2_ref, b2_ref, o_ref, acc_ref):
    # grid = (row_tiles, hidden_tiles); axis 1 is the hidden-dim reduction.
    # Wrapper guarantees num_programs(1) >= 2.
    k = pl.program_id(1)
    nk = pl.num_programs(1)

    h = jnp.dot(x_ref[...], w1_ref[...],
                preferred_element_type=jnp.float32) + b1_ref[...]
    h = jax.nn.gelu(h, approximate=True)
    partial = jnp.dot(h.astype(jnp.bfloat16), w2_ref[...],
                      preferred_element_type=jnp.float32)

    @pl.when(k == 0)
    def _():
        acc_ref[...] = partial

    @pl.when(jnp.logical_and(k > 0, k < nk - 1))
    def _():
        acc_ref[...] += partial

    @pl.when(k == nk - 1)
    def _():
        # Fused finalize: last partial never round-trips through the scratch.
        o_ref[...] = (acc_ref[...] + partial + b2_ref[...]).astype(o_ref.dtype)


# ------------------------------ wrapper / tiling -----------------------------

def _round_up(x, m):
    return -(-x // m) * m


def _vmem_capacity_bytes():
    try:
        return int(pltpu.get_tpu_info().vmem_capacity_bytes)
    except Exception:
        return 64 << 20   # conservative default (v7x per-TensorCore)


def _pick_hidden_tile(hp, cap=1024):
    # Largest multiple of 128 dividing hp (<= cap). hp is a multiple of 128,
    # so 128 always qualifies.
    if hp <= cap:
        return hp
    t = cap - cap % 128
    while t >= 128:
        if hp % t == 0:
            return t
        t -= 128
    return hp


def _est_resident(tm, cp, hp, out_bytes):
    x_t = 2 * tm * cp * 2                 # bf16 row tiles, double-buffered
    w_t = 2 * (cp * hp + hp * cp) * 2     # bf16 weights (count 2 buffers)
    b_t = 2 * (hp + cp) * 4
    o_t = 2 * tm * cp * out_bytes
    inter = 2 * tm * hp * 4               # f32 GELU intermediate + slack
    return x_t + w_t + b_t + o_t + inter


def _est_tiled(tm, th, cp, out_bytes):
    x_t = 2 * tm * cp * 2
    w_t = 2 * (cp * th + th * cp) * 2
    b_t = 2 * (th + cp) * 4
    o_t = 2 * tm * cp * out_bytes
    acc = tm * cp * 4
    inter = 2 * tm * th * 4
    return x_t + w_t + b_t + o_t + acc + inter


def ffn(x, w1, b1, w2, b2, *, row_tile_cap=512):
    """x: (..., C); w1: (C, H); b1: (H,); w2: (H, C); b2: (C,)."""
    orig_shape = x.shape
    c = orig_shape[-1]
    h_dim = w1.shape[1]
    out_dtype = x.dtype
    out_bytes = jnp.dtype(out_dtype).itemsize

    x2 = x.reshape(-1, c)
    m = x2.shape[0]

    # Lane-dense padding: channels and hidden to multiples of 128.
    cp = _round_up(c, 128)
    hp = _round_up(h_dim, 128)

    cap = _vmem_capacity_bytes()
    budget = int(cap * 0.55)              # headroom for compiler scratch
    vmem_clamp = int(cap * 0.72)

    # Row tile: big, multiple of 16 (bf16 sublane pairs), and >= 2 tiles so
    # both v7x TensorCores get work when M allows it.
    tm = min(row_tile_cap, _round_up(m, 16))
    if _round_up(m, tm) // tm < 2 and m > 16:
        tm = _round_up((m + 1) // 2, 16)

    # Path selection: keep bf16 weights fully VMEM-resident when they fit
    # (DMA'd once for the whole call -> MXU-bound); shrink tm before giving up.
    resident = _est_resident(tm, cp, hp, out_bytes) <= budget
    if not resident:
        t = tm
        while t > 64 and _est_resident(t, cp, hp, out_bytes) > budget:
            t = max(16, _round_up(t // 2, 16))
        if _est_resident(t, cp, hp, out_bytes) <= budget:
            tm, resident = t, True

    th = hp
    if not resident:
        th = _pick_hidden_tile(hp)
        if hp // th < 2:                  # degenerate: just run resident
            resident = True
        else:
            while tm > 16 and _est_tiled(tm, th, cp, out_bytes) > budget:
                tm = max(16, _round_up(tm // 2, 16))

    mp = _round_up(m, tm)

    # Pad + pre-cast once in the wrapper (halves x/weight DMA bytes).
    xb = jnp.pad(x2, ((0, mp - m), (0, cp - c))).astype(jnp.bfloat16)
    w1p = jnp.pad(w1, ((0, cp - c), (0, hp - h_dim))).astype(jnp.bfloat16)
    w2p = jnp.pad(w2, ((0, hp - h_dim), (0, cp - c))).astype(jnp.bfloat16)
    b1p = jnp.pad(b1, (0, hp - h_dim)).reshape(1, hp).astype(jnp.float32)
    b2p = jnp.pad(b2, (0, cp - c)).reshape(1, cp).astype(jnp.float32)

    if resident:
        est = _est_resident(tm, cp, hp, out_bytes)
        grid = (mp // tm,)
        in_specs = [
            pl.BlockSpec((tm, cp), lambda i: (i, 0)),     # x rows (bf16)
            pl.BlockSpec((cp, hp), lambda i: (0, 0)),     # w1 (resident)
            pl.BlockSpec((1, hp), lambda i: (0, 0)),      # b1
            pl.BlockSpec((hp, cp), lambda i: (0, 0)),     # w2 (resident)
            pl.BlockSpec((1, cp), lambda i: (0, 0)),      # b2
        ]
        out_specs = pl.BlockSpec((tm, cp), lambda i: (i, 0))
        scratch = []
        kernel = _ffn_kernel_resident
        dims = ("parallel",)
    else:
        est = _est_tiled(tm, th, cp, out_bytes)
        grid = (mp // tm, hp // th)
        in_specs = [
            pl.BlockSpec((tm, cp), lambda i, k: (i, 0)),  # x rows (bf16)
            pl.BlockSpec((cp, th), lambda i, k: (0, k)),  # w1 hidden tile
            pl.BlockSpec((1, th), lambda i, k: (0, k)),   # b1 hidden tile
            pl.BlockSpec((th, cp), lambda i, k: (k, 0)),  # w2 hidden tile
            pl.BlockSpec((1, cp), lambda i, k: (0, 0)),   # b2
        ]
        out_specs = pl.BlockSpec((tm, cp), lambda i, k: (i, 0))
        scratch = [pltpu.VMEM((tm, cp), jnp.float32)]
        kernel = _ffn_kernel_tiled
        dims = ("parallel", "arbitrary")

    vmem_limit = int(min(max(2 * est, 32 << 20), max(vmem_clamp, 32 << 20)))

    out = pl.pallas_call(
        kernel,
        out_shape=jax.ShapeDtypeStruct((mp, cp), out_dtype),
        grid_spec=pltpu.PrefetchScalarGridSpec(
            num_scalar_prefetch=0,
            grid=grid,
            in_specs=in_specs,
            out_specs=out_specs,
            scratch_shapes=scratch,
        ),
        compiler_params=pltpu.CompilerParams(
            dimension_semantics=dims,
            vmem_limit_bytes=vmem_limit,
        ),
    )(xb, w1p, b1p, w2p, b2p)

    out = out[:m, :c]                     # drop row + lane padding
    return out.reshape(orig_shape)


# ---------------------------------- main -------------------------------------

if __name__ == "__main__":
    key = jax.random.PRNGKey(0)
    kx, k1, k2, k3, k4 = jax.random.split(key, 5)

    # Small shapes consistent with the module: tokens (B, L, C), hidden = 4*C.
    B, L, C = 2, 64, 32
    H = 4 * C

    x = jax.random.normal(kx, (B, L, C), jnp.float32)
    w1 = jax.random.normal(k1, (C, H), jnp.float32) * 0.1
    b1 = jax.random.normal(k2, (H,), jnp.float32) * 0.1
    w2 = jax.random.normal(k3, (H, C), jnp.float32) * 0.1
    b2 = jax.random.normal(k4, (C,), jnp.float32) * 0.1

    out = ffn(x, w1, b1, w2, b2)
    jax.block_until_ready(out)

    # f32 / exact-GELU reference (PyTorch nn.GELU default semantics).
    h_ref = x @ w1 + b1
    h_ref = 0.5 * h_ref * (1.0 + jax.lax.erf(h_ref / math.sqrt(2.0)))
    ref = h_ref @ w2 + b2

    assert out.shape == ref.shape
    assert bool(jnp.all(jnp.isfinite(out)))
    max_err = float(jnp.max(jnp.abs(out - ref)))
    # bf16 MXU inputs + tanh GELU vs f32/exact reference: ~1e-3; 5e-2 is ample.
    assert max_err < 5e-2, f"max abs err {max_err}"

    print("KERNEL_OK")
</pallas_src>

<mosaic_0001>
module attributes {stable_mosaic.version = 11 : i64} {
  func.func @_ffn_kernel_resident(%arg0: i32, %arg1: memref<64x128xbf16, #tpu.memory_space<vmem>>, %arg2: memref<128x128xbf16, #tpu.memory_space<vmem>>, %arg3: memref<1x128xf32, #tpu.memory_space<vmem>>, %arg4: memref<128x128xbf16, #tpu.memory_space<vmem>>, %arg5: memref<1x128xf32, #tpu.memory_space<vmem>>, %arg6: memref<64x128xf32, #tpu.memory_space<vmem>>) attributes {dimension_semantics = [#tpu.dimension_semantics<parallel>], iteration_bounds = array<i64: 2>, scalar_prefetch = 0 : i64, scratch_operands = 0 : i64, tpu.core_type = #tpu.core_type<tc>, window_params = [{transform_indices = @transform_0, window_bounds = array<i64: 64, 128>}, {pipeline_mode = #tpu.pipeline_mode<synchronous>, transform_indices = @transform_1, window_bounds = array<i64: 128, 128>}, {pipeline_mode = #tpu.pipeline_mode<synchronous>, transform_indices = @transform_2, window_bounds = array<i64: 1, 128>}, {pipeline_mode = #tpu.pipeline_mode<synchronous>, transform_indices = @transform_3, window_bounds = array<i64: 128, 128>}, {pipeline_mode = #tpu.pipeline_mode<synchronous>, transform_indices = @transform_4, window_bounds = array<i64: 1, 128>}, {transform_indices = @transform_5, window_bounds = array<i64: 64, 128>}]} {
    %c0 = arith.constant 0 : index
    %c0_0 = arith.constant 0 : index
    %0 = vector.load %arg1[%c0, %c0_0] : memref<64x128xbf16, #tpu.memory_space<vmem>>, vector<64x128xbf16>
    %c0_1 = arith.constant 0 : index
    %c0_2 = arith.constant 0 : index
    %1 = vector.load %arg2[%c0_1, %c0_2] : memref<128x128xbf16, #tpu.memory_space<vmem>>, vector<128x128xbf16>
    %cst = arith.constant dense<0.000000e+00> : vector<64x128xf32>
    %2 = tpu.matmul %0, %1, %cst {dimension_numbers = #tpu.dot_dimension_numbers<[1], [0], [0], [1], [0, 0, 1, 1], [], []>} : vector<64x128xbf16>, vector<128x128xbf16>, vector<64x128xf32> -> vector<64x128xf32>
    %c0_3 = arith.constant 0 : index
    %c0_4 = arith.constant 0 : index
    %3 = vector.load %arg3[%c0_3, %c0_4] : memref<1x128xf32, #tpu.memory_space<vmem>>, vector<1x128xf32>
    %4 = vector.broadcast %3 : vector<1x128xf32> to vector<64x128xf32>
    %5 = arith.addf %2, %4 : vector<64x128xf32>
    %6 = arith.mulf %5, %5 : vector<64x128xf32>
    %7 = arith.mulf %5, %6 : vector<64x128xf32>
    %cst_5 = arith.constant 4.471500e-02 : f32
    %8 = vector.broadcast %cst_5 : f32 to vector<64x128xf32>
    %9 = arith.mulf %8, %7 : vector<64x128xf32>
    %10 = arith.addf %5, %9 : vector<64x128xf32>
    %cst_6 = arith.constant 0.797884583 : f32
    %11 = vector.broadcast %cst_6 : f32 to vector<64x128xf32>
    %12 = arith.mulf %11, %10 : vector<64x128xf32>
    %13 = math.tanh %12 : vector<64x128xf32>
    %cst_7 = arith.constant 1.000000e+00 : f32
    %14 = vector.broadcast %cst_7 : f32 to vector<64x128xf32>
    %15 = arith.addf %14, %13 : vector<64x128xf32>
    %cst_8 = arith.constant 5.000000e-01 : f32
    %16 = vector.broadcast %cst_8 : f32 to vector<64x128xf32>
    %17 = arith.mulf %16, %15 : vector<64x128xf32>
    %18 = arith.mulf %5, %17 : vector<64x128xf32>
    %19 = arith.truncf %18 : vector<64x128xf32> to vector<64x128xbf16>
    %c0_9 = arith.constant 0 : index
    %c0_10 = arith.constant 0 : index
    %20 = vector.load %arg4[%c0_9, %c0_10] : memref<128x128xbf16, #tpu.memory_space<vmem>>, vector<128x128xbf16>
    %cst_11 = arith.constant dense<0.000000e+00> : vector<64x128xf32>
    %21 = tpu.matmul %19, %20, %cst_11 {dimension_numbers = #tpu.dot_dimension_numbers<[1], [0], [0], [1], [0, 0, 1, 1], [], []>} : vector<64x128xbf16>, vector<128x128xbf16>, vector<64x128xf32> -> vector<64x128xf32>
    %c0_12 = arith.constant 0 : index
    %c0_13 = arith.constant 0 : index
    %22 = vector.load %arg5[%c0_12, %c0_13] : memref<1x128xf32, #tpu.memory_space<vmem>>, vector<1x128xf32>
    %23 = vector.broadcast %22 : vector<1x128xf32> to vector<64x128xf32>
    %24 = arith.addf %21, %23 : vector<64x128xf32>
    %c0_14 = arith.constant 0 : index
    %c0_15 = arith.constant 0 : index
    %25 = vector.load %arg6[%c0_14, %c0_15] : memref<64x128xf32, #tpu.memory_space<vmem>>, vector<64x128xf32>
    tpu.vector_store %arg6[%c0_14, %c0_15], %24 {strides = array<i32>} : memref<64x128xf32, #tpu.memory_space<vmem>>, vector<64x128xf32>,
    return
  }
  func.func @transform_0(%arg0: i32) -> (i32, i32) {
    %c0_i32 = arith.constant 0 : i32
    %c0_i32_0 = arith.constant 0 : i32
    return %arg0, %c0_i32 : i32, i32
  }
  func.func @transform_1(%arg0: i32) -> (i32, i32) {
    %c0_i32 = arith.constant 0 : i32
    %c0_i32_0 = arith.constant 0 : i32
    %c0_i32_1 = arith.constant 0 : i32
    return %c0_i32, %c0_i32_0 : i32, i32
  }
  func.func @transform_2(%arg0: i32) -> (i32, i32) {
    %c0_i32 = arith.constant 0 : i32
    %c0_i32_0 = arith.constant 0 : i32
    %c0_i32_1 = arith.constant 0 : i32
    return %c0_i32, %c0_i32_0 : i32, i32
  }
  func.func @transform_3(%arg0: i32) -> (i32, i32) {
    %c0_i32 = arith.constant 0 : i32
    %c0_i32_0 = arith.constant 0 : i32
    %c0_i32_1 = arith.constant 0 : i32
    return %c0_i32, %c0_i32_0 : i32, i32
  }
  func.func @transform_4(%arg0: i32) -> (i32, i32) {
    %c0_i32 = arith.constant 0 : i32
    %c0_i32_0 = arith.constant 0 : i32
    %c0_i32_1 = arith.constant 0 : i32
    return %c0_i32, %c0_i32_0 : i32, i32
  }
  func.func @transform_5(%arg0: i32) -> (i32, i32) {
    %c0_i32 = arith.constant 0 : i32
    %c0_i32_0 = arith.constant 0 : i32
    return %arg0, %c0_i32 : i32, i32
  }
}

</mosaic_0001>

<llo_original>
// kernel: tpu_custom_call.1
$region0: #{tpu_custom_call.1}
  #allocation0 [shape = 'u32[]', space=smem, size = 0x4, offset = 0x4, fixed_abs, tag = 'smem constant byte address 0x4 - core index']
  #allocation1 [shape = 'u32[144,128]{1,0:T(1,128)}', space=vmem, size = 0x12000, scoped, tag = 'internal scratch']
  %s0 = inlined_call_operand.hbm [shape: bf16[128,128], index: 0, kind: input, shape index: {}]
  %s1 = inlined_call_operand.hbm [shape: bf16[128,128], index: 1, kind: input, shape index: {}]
  %s2 = inlined_call_operand.vmem [shape: f32[1,128], index: 2, kind: input, shape index: {}]
  %s3 = inlined_call_operand.hbm [shape: bf16[128,128], index: 3, kind: input, shape index: {}]
  %s4 = inlined_call_operand.vmem [shape: f32[1,128], index: 4, kind: input, shape index: {}]
  %s5 = inlined_call_operand.hbm [shape: f32[128,128], index: 5, kind: output, shape index: {}]
  %s6 = sld [smem:[#allocation0]]
  $region65: #{tpu_custom_call.1} parent=0
    _
  %s8 = ssub.s32 1, %s6
  %s9 = scalar_select 0, %s8, %s6
  $region1: #{tpu_custom_call.1} parent=0
    #allocation2 [shape = 'u8[32768]{0}', space=vmem, size = 0x8000, scoped, tag = 'input window, operand 0']
    #allocation3 [shape = 's32[2]{0}', space=sflag, size = 0x8, scoped, tag = 'scoped memory for tpu_custom_call.1']
    #allocation4 [shape = 's32[2]{0}', space=sflag, size = 0x8, scoped, tag = 'scoped memory for tpu_custom_call.1']
    #allocation5 [shape = 'u8[32768]{0}', space=vmem, size = 0x8000, scoped, tag = 'input window, operand 1, single buffered']
    #allocation6 [shape = 's32[1]{0}', space=sflag, size = 0x4, scoped, tag = 'scoped memory for tpu_custom_call.1']
    #allocation7 [shape = 'u8[32768]{0}', space=vmem, size = 0x8000, scoped, tag = 'input window, operand 3, single buffered']
    #allocation8 [shape = 'u8[65536]{0}', space=vmem, size = 0x10000, scoped, tag = 'output window, operand 0']
    %10 = vsyncpa [#allocation3], 0
    %s11 = scalar_lea.sflag [#allocation3], 1
    %12 = vsyncpa %s11, 0
    %13 = vsyncpa [#allocation6], 0
    %14 = vsyncpa [#allocation4], 0
    %s15 = scalar_lea.sflag [#allocation4], 1
    %16 = vsyncpa %s15, 0
    loop: start=0, step=1, limit=4
    $region2: #{tpu_custom_call.1} parent=1 // loop_pre_header
      _
    $region3: #{tpu_custom_call.1} parent=1 // loop_header
      %s18 = sphi 0, %s22
      %p19 = scmp.ge.s32.totalorder %s18, 4
      %s28 = sphi 0, %s30
      %s31 = sphi 0, %s28
      %s32 = sphi 0, %s31
      %s48 = sphi 0, %s32
      %s52 = sphi 0, %s52
      %s54 = sphi 0, %s52
      %s55 = sphi 0, %s54
      %s69 = sphi 0, %s55
      %s73 = sphi 0, %s73
      %s75 = sphi 0, %s73
      %s76 = sphi 0, %s75
      %s90 = sphi 0, %s76
      %s94 = sphi 0, %s94
      %s96 = sphi 0, %s94
      %s97 = sphi 0, %s96
      %s111 = sphi 0, %s97
      %s115 = sphi 0, %s115
      %s117 = sphi 0, %s115
      %s118 = sphi 0, %s117
      %s132 = sphi 0, %s118
      %s138 = sphi 0, %s140
      %s141 = sphi 0, %s138
      %s142 = sphi 0, %s141
      %s158 = sphi 0, %s142
    $region4: #{tpu_custom_call.1} parent=1 // loop_header_branch
      %21 = sbr.rel (%p19) target = $region8
    $region5: #{tpu_custom_call.1} parent=1 // loop_body
      %s23 = ssub.s32 %s18, 1
      %s24 = ssub.s32 %s18, 2
      %s25 = sadd.s32 %s18, 1
      %s26 = ssub.s32 %s18, %s25
      %p27 = scmp.eq.s32.totalorder %s26, 0
      %s29 = sadd.s32 %s28, 1
      %s30 = scalar_select %p27, %s28, %s29
      %p33 = pneg %p27
      %p34 = scmp.eq.s32.totalorder %s18, 1
      %p35 = por %p33, %p34
      %p36 = scmp.ne.s32.totalorder %s28, %s31
      %p37 = scmp.eq.s32.totalorder %s18, 0
      %p38 = por %p36, %p37
      %p39 = scmp.ne.s32.totalorder %s28, %s31
      %p40 = scmp.eq.s32.totalorder %s23, 1
      %p41 = por %p39, %p40
      %p42 = scmp.ne.s32.totalorder %s31, %s32
      %p43 = scmp.eq.s32.totalorder %s23, 0
      %p44 = por %p42, %p43
      %p45 = scmp.ne.s32.totalorder %s31, %s32
      %p46 = scmp.eq.s32.totalorder %s24, 1
      %p47 = por %p45, %p46
      %p49 = scmp.ne.s32.totalorder %s32, %s48
      %p50 = scmp.eq.s32.totalorder %s24, 0
      %p51 = por %p49, %p50
      %s53 = sadd.s32 %s52, 1
      %p56 = scmp.eq.s32.totalorder %s18, 1
      %p57 = scmp.ne.s32.totalorder %s52, %s54
      %p58 = scmp.eq.s32.totalorder %s18, 0
      %p59 = por %p57, %p58
      %p60 = scmp.ne.s32.totalorder %s52, %s54
      %p61 = scmp.eq.s32.totalorder %s23, 1
      %p62 = por %p60, %p61
      %p63 = scmp.ne.s32.totalorder %s54, %s55
      %p64 = scmp.eq.s32.totalorder %s23, 0
      %p65 = por %p63, %p64
      %p66 = scmp.ne.s32.totalorder %s54, %s55
      %p67 = scmp.eq.s32.totalorder %s24, 1
      %p68 = por %p66, %p67
      %p70 = scmp.ne.s32.totalorder %s55, %s69
      %p71 = scmp.eq.s32.totalorder %s24, 0
      %p72 = por %p70, %p71
      %s74 = sadd.s32 %s73, 1
      %p77 = scmp.eq.s32.totalorder %s18, 1
      %p78 = scmp.ne.s32.totalorder %s73, %s75
      %p79 = scmp.eq.s32.totalorder %s18, 0
      %p80 = por %p78, %p79
      %p81 = scmp.ne.s32.totalorder %s73, %s75
      %p82 = scmp.eq.s32.totalorder %s23, 1
      %p83 = por %p81, %p82
      %p84 = scmp.ne.s32.totalorder %s75, %s76
      %p85 = scmp.eq.s32.totalorder %s23, 0
      %p86 = por %p84, %p85
      %p87 = scmp.ne.s32.totalorder %s75, %s76
      %p88 = scmp.eq.s32.totalorder %s24, 1
      %p89 = por %p87, %p88
      %p91 = scmp.ne.s32.totalorder %s76, %s90
      %p92 = scmp.eq.s32.totalorder %s24, 0
      %p93 = por %p91, %p92
      %s95 = sadd.s32 %s94, 1
      %p98 = scmp.eq.s32.totalorder %s18, 1
      %p99 = scmp.ne.s32.totalorder %s94, %s96
      %p100 = scmp.eq.s32.totalorder %s18, 0
      %p101 = por %p99, %p100
      %p102 = scmp.ne.s32.totalorder %s94, %s96
      %p103 = scmp.eq.s32.totalorder %s23, 1
      %p104 = por %p102, %p103
      %p105 = scmp.ne.s32.totalorder %s96, %s97
      %p106 = scmp.eq.s32.totalorder %s23, 0
      %p107 = por %p105, %p106
      %p108 = scmp.ne.s32.totalorder %s96, %s97
      %p109 = scmp.eq.s32.totalorder %s24, 1
      %p110 = por %p108, %p109
      %p112 = scmp.ne.s32.totalorder %s97, %s111
      %p113 = scmp.eq.s32.totalorder %s24, 0
      %p114 = por %p112, %p113
      %s116 = sadd.s32 %s115, 1
      %p119 = scmp.eq.s32.totalorder %s18, 1
      %p120 = scmp.ne.s32.totalorder %s115, %s117
      %p121 = scmp.eq.s32.totalorder %s18, 0
      %p122 = por %p120, %p121
      %p123 = scmp.ne.s32.totalorder %s115, %s117
      %p124 = scmp.eq.s32.totalorder %s23, 1
      %p125 = por %p123, %p124
      %p126 = scmp.ne.s32.totalorder %s117, %s118
      %p127 = scmp.eq.s32.totalorder %s23, 0
      %p128 = por %p126, %p127
      %p129 = scmp.ne.s32.totalorder %s117, %s118
      %p130 = scmp.eq.s32.totalorder %s24, 1
      %p131 = por %p129, %p130
      %p133 = scmp.ne.s32.totalorder %s118, %s132
      %p134 = scmp.eq.s32.totalorder %s24, 0
      %p135 = por %p133, %p134
      %s136 = ssub.s32 %s18, %s25
      %p137 = scmp.eq.s32.totalorder %s136, 0
      %s139 = sadd.s32 %s138, 1
      %s140 = scalar_select %p137, %s138, %s139
      %p143 = pneg %p137
      %p144 = scmp.eq.s32.totalorder %s18, 1
      %p145 = por %p143, %p144
      %p146 = scmp.ne.s32.totalorder %s138, %s141
      %p147 = scmp.eq.s32.totalorder %s18, 0
      %p148 = por %p146, %p147
      %p149 = scmp.ne.s32.totalorder %s138, %s141
      %p150 = scmp.eq.s32.totalorder %s23, 1
      %p151 = por %p149, %p150
      %p152 = scmp.ne.s32.totalorder %s141, %s142
      %p153 = scmp.eq.s32.totalorder %s23, 0
      %p154 = por %p152, %p153
      %p155 = scmp.ne.s32.totalorder %s141, %s142
      %p156 = scmp.eq.s32.totalorder %s24, 1
      %p157 = por %p155, %p156
      %p159 = scmp.ne.s32.totalorder %s142, %s158
      %p160 = scmp.eq.s32.totalorder %s24, 0
      %p161 = por %p159, %p160
      %p162 = scmp.le.s32.totalorder 1, %s18
      %p163 = scmp.lt.s32.totalorder %s18, 3
      %p164 = pnand %p162, %p163
      %p165 = pneg %p164
      // Predicated region
      $region9: #{tpu_custom_call.1} parent=5 // pred_check
        _
      $region10: #{tpu_custom_call.1} parent=5 // pred_check_branch
        %167 = sbr.rel (%p164) target = $region12
      $region11: #{tpu_custom_call.1} parent=5 // pred_region
        %s168 = ssub.s32 %s18, 1
        // Predicated region
        $region13: #{tpu_custom_call.1} parent=11 // pred_check
          %p169 = pneg %p65
        $region14: #{tpu_custom_call.1} parent=11 // pred_check_branch
          %171 = sbr.rel (%p169) target = $region16
        $region15: #{tpu_custom_call.1} parent=11 // pred_region
          %s173 = ssub.s32 1024, 1024
          %174 = vsyncadd [#allocation6], %s173
          %s175 = sshll.u32 [#allocation5], 4
          %s176 = int_to_ptr.vmem [resolvable:$true] %s175
          %181 = dma.hbm_to_vmem [thread:$0]  %s1, 1024, %s176, [#allocation6], 64, 64, 4
        $region16: #{tpu_custom_call.1} parent=11 // pred_fallthru
          _
        // Predicated region
        $region17: #{tpu_custom_call.1} parent=11 // pred_check
          %p182 = pneg %p86
        $region18: #{tpu_custom_call.1} parent=11 // pred_check_branch
          %184 = sbr.rel (%p182) target = $region20
        $region19: #{tpu_custom_call.1} parent=11 // pred_region
          _
        $region20: #{tpu_custom_call.1} parent=11 // pred_fallthru
          _
        // Predicated region
        $region21: #{tpu_custom_call.1} parent=11 // pred_check
          %p185 = pneg %p107
        $region22: #{tpu_custom_call.1} parent=11 // pred_check_branch
          %187 = sbr.rel (%p185) target = $region24
        $region23: #{tpu_custom_call.1} parent=11 // pred_region
          %s189 = ssub.s32 1024, 1024
          %190 = vsyncadd [#allocation6], %s189
          %s191 = sshll.u32 [#allocation7], 4
          %s192 = int_to_ptr.vmem [resolvable:$true] %s191
          %197 = dma.hbm_to_vmem [thread:$0]  %s3, 1024, %s192, [#allocation6], 64, 64, 4
        $region24: #{tpu_custom_call.1} parent=11 // pred_fallthru
          _
        // Predicated region
        $region25: #{tpu_custom_call.1} parent=11 // pred_check
          %p198 = pneg %p128
        $region26: #{tpu_custom_call.1} parent=11 // pred_check_branch
          %200 = sbr.rel (%p198) target = $region28
        $region27: #{tpu_custom_call.1} parent=11 // pred_region
          _
        $region28: #{tpu_custom_call.1} parent=11 // pred_fallthru
          _
      $region12: #{tpu_custom_call.1} parent=5 // pred_fallthru
        _
      %p201 = scmp.lt.s32.totalorder %s18, 2
      // Predicated region
      $region29: #{tpu_custom_call.1} parent=5 // pred_check
        %p202 = pneg %p201
      $region30: #{tpu_custom_call.1} parent=5 // pred_check_branch
        %204 = sbr.rel (%p202) target = $region32
      $region31: #{tpu_custom_call.1} parent=5 // pred_region
        // Predicated region
        $region33: #{tpu_custom_call.1} parent=31 // pred_check
          %p205 = pneg %p38
        $region34: #{tpu_custom_call.1} parent=31 // pred_check_branch
          %207 = sbr.rel (%p205) target = $region36
        $region35: #{tpu_custom_call.1} parent=31 // pred_region
          %s208 = sand.u32 %s28, 1
          %s209 = scalar_lea.sflag [#allocation3], %s208
          %s210 = sand.u32 %s28, 1
          %s211 = smul.addr %s210, 32
          %s212 = scalar_lea.vmem [#allocation2], %s211
          %s213 = smul.u32 8, %s18
          %s215 = ssub.s32 512, 512
          %216 = vsyncadd %s209, %s215
          %s217 = smul.addr %s213, 64
          %s218 = scalar_lea.hbm %s0, %s217
          %s219 = sshll.u32 %s212, 4
          %s220 = int_to_ptr.vmem [resolvable:$true] %s219
          %225 = dma.hbm_to_vmem [thread:$0]  %s218, 512, %s220, %s209, 64, 64, 4
        $region36: #{tpu_custom_call.1} parent=31 // pred_fallthru
          _
      $region32: #{tpu_custom_call.1} parent=5 // pred_fallthru
        _
      %p226 = scmp.le.s32.totalorder 1, %s18
      %p227 = scmp.lt.s32.totalorder %s18, 3
      %p228 = pnand %p226, %p227
      %p229 = pneg %p228
      // Predicated region
      $region37: #{tpu_custom_call.1} parent=5 // pred_check
        _
      $region38: #{tpu_custom_call.1} parent=5 // pred_check_branch
        %231 = sbr.rel (%p228) target = $region40
      $region39: #{tpu_custom_call.1} parent=5 // pred_region
        %s232 = ssub.s32 %s18, 1
        %s233 = sand.u32 %s31, 1
        %s234 = scalar_lea.sflag [#allocation3], %s233
        %s235 = sand.u32 %s31, 1
        %s236 = smul.addr %s235, 32
        %s237 = scalar_lea.vmem [#allocation2], %s236
        // Predicated region
        $region41: #{tpu_custom_call.1} parent=39 // pred_check
          %p238 = pneg %p44
        $region42: #{tpu_custom_call.1} parent=39 // pred_check_branch
          %240 = sbr.rel (%p238) target = $region44
        $region43: #{tpu_custom_call.1} parent=39 // pred_region
          %241 = dma.done %s234, 512
        $region44: #{tpu_custom_call.1} parent=39 // pred_fallthru
          _
        // Predicated region
        $region45: #{tpu_custom_call.1} parent=39 // pred_check
          %p242 = pneg %p65
        $region46: #{tpu_custom_call.1} parent=39 // pred_check_branch
          %244 = sbr.rel (%p242) target = $region48
        $region47: #{tpu_custom_call.1} parent=39 // pred_region
          %245 = dma.done [#allocation6], 1024
        $region48: #{tpu_custom_call.1} parent=39 // pred_fallthru
          _
        // Predicated region
        $region49: #{tpu_custom_call.1} parent=39 // pred_check
          %p246 = pneg %p107
        $region50: #{tpu_custom_call.1} parent=39 // pred_check_branch
          %248 = sbr.rel (%p246) target = $region52
        $region51: #{tpu_custom_call.1} parent=39 // pred_region
          %249 = dma.done [#allocation6], 1024
        $region52: #{tpu_custom_call.1} parent=39 // pred_fallthru
          _
        %s250 = sand.u32 %s31, 1
        %s251 = scalar_lea.sflag [#allocation3], %s250
        %s252 = sand.u32 %s31, 1
        %s253 = smul.addr %s252, 32
        %s254 = scalar_lea.vmem [#allocation2], %s253
        %p255 = pneg %p44
        %p256 = pneg %p41
        %p257 = pneg %p65
        %p258 = pneg %p62
        %p259 = pneg %p86
        %p260 = pneg %p83
        %p261 = pneg %p107
        %p262 = pneg %p104
        %p263 = pneg %p128
        %p264 = pneg %p125
        %p265 = pneg %p154
        %p266 = pneg %p151
        %s267 = sand.u32 %s141, 1
        %s268 = scalar_lea.sflag [#allocation4], %s267
        %s269 = sand.u32 %s141, 1
        %s270 = smul.addr %s269, 64
        %s271 = scalar_lea.vmem [#allocation8], %s270
        %s272 = smul.u32 8, %s23
        %s273 = smul.u32 8, %s23
        %v275 = vld [vmem:[%s237] sm:$0xf]
        %v276 = vld [vmem:[%s237 + $0x4] sm:$0xf]
        %v277 = vld [vmem:[%s237 + $0x8] sm:$0xf]
        %v278 = vld [vmem:[%s237 + $0xc] sm:$0xf]
        %v279 = vld [vmem:[%s237 + $0x10] sm:$0xf]
        %v280 = vld [vmem:[%s237 + $0x14] sm:$0xf]
        %v281 = vld [vmem:[%s237 + $0x18] sm:$0xf]
        %v282 = vld [vmem:[%s237 + $0x1c] sm:$0xf]
        %v283 = vld [vmem:[#allocation5] sm:$0xf]
        %v284 = vld [vmem:[#allocation5 + $0x4] sm:$0xf]
        %v285 = vld [vmem:[#allocation5 + $0x8] sm:$0xf]
        %v286 = vld [vmem:[#allocation5 + $0xc] sm:$0xf]
        %v287 = vld [vmem:[#allocation5 + $0x10] sm:$0xf]
        %v288 = vld [vmem:[#allocation5 + $0x14] sm:$0xf]
        %v289 = vld [vmem:[#allocation5 + $0x18] sm:$0xf]
        %v290 = vld [vmem:[#allocation5 + $0x1c] sm:$0xf]
        %v291 = vld [vmem:[#allocation5 + $0x20] sm:$0xf]
        %v292 = vld [vmem:[#allocation5 + $0x24] sm:$0xf]
        %v293 = vld [vmem:[#allocation5 + $0x28] sm:$0xf]
        %v294 = vld [vmem:[#allocation5 + $0x2c] sm:$0xf]
        %v295 = vld [vmem:[#allocation5 + $0x30] sm:$0xf]
        %v296 = vld [vmem:[#allocation5 + $0x34] sm:$0xf]
        %v297 = vld [vmem:[#allocation5 + $0x38] sm:$0xf]
        %v298 = vld [vmem:[#allocation5 + $0x3c] sm:$0xf]
        %v299 = vld [vmem:[%s2] sm:$0x1]
        %v301 = vlaneseq
        %v302 = vshrl.u32 %v301, 7
        %v303 = vsub.s32 0, %v302
        %v304 = vrot.slane %v299, %v303
        %v314 = vunpack.c.l.b16 %v275
        %v315 = vunpack.c.l.b16 %v276
        %v316 = vunpack.c.l.b16 %v277
        %v317 = vunpack.c.l.b16 %v278
        %v318 = vunpack.c.l.b16 %v279
        %v319 = vunpack.c.l.b16 %v280
        %v320 = vunpack.c.l.b16 %v281
        %v321 = vunpack.c.l.b16 %v282
        %v322 = vpack.c.b16 %v315, %v314
        %v323 = vpack.c.b16 %v317, %v316
        %v324 = vpack.c.b16 %v319, %v318
        %v325 = vpack.c.b16 %v321, %v320
        %v346 = vunpack.c.l.b16 %v283
        %v347 = vunpack.c.l.b16 %v284
        %v348 = vunpack.c.l.b16 %v285
        %v349 = vunpack.c.l.b16 %v286
        %v350 = vunpack.c.l.b16 %v287
        %v351 = vunpack.c.l.b16 %v288
        %v352 = vunpack.c.l.b16 %v289
        %v353 = vunpack.c.l.b16 %v290
        %v354 = vunpack.c.l.b16 %v291
        %v355 = vunpack.c.l.b16 %v292
        %v356 = vunpack.c.l.b16 %v293
        %v357 = vunpack.c.l.b16 %v294
        %v358 = vunpack.c.l.b16 %v295
        %v359 = vunpack.c.l.b16 %v296
        %v360 = vunpack.c.l.b16 %v297
        %v361 = vunpack.c.l.b16 %v298
        %v362 = vpack.c.b16 %v347, %v346
        %v363 = vpack.c.b16 %v349, %v348
        %v364 = vpack.c.b16 %v351, %v350
        %v365 = vpack.c.b16 %v353, %v352
        %v366 = vpack.c.b16 %v355, %v354
        %v367 = vpack.c.b16 %v357, %v356
        %v368 = vpack.c.b16 %v359, %v358
        %v369 = vpack.c.b16 %v361, %v360
        %378 = vmatprep.subr.bf16.mxu0 0
        %379 = vmatpush1.bf16.msra.mxu0 %v362
        %380 = vmatprep.subr.bf16.mxu0 0
        %381 = vmatpush1.bf16.msra.mxu0 %v363
        %382 = vmatprep.subr.bf16.mxu0 0
        %383 = vmatpush1.bf16.msra.mxu0 %v364
        %384 = vmatprep.subr.bf16.mxu0 0
        %385 = vmatpush1.bf16.msra.mxu0 %v365
        %386 = vmatprep.subr.bf16.mxu0 0
        %387 = vmatpush1.bf16.msra.mxu0 %v366
        %388 = vmatprep.subr.bf16.mxu0 0
        %389 = vmatpush1.bf16.msra.mxu0 %v367
        %390 = vmatprep.subr.bf16.mxu0 0
        %391 = vmatpush1.bf16.msra.mxu0 %v368
        %392 = vmatprep.subr.bf16.mxu0 0
        %393 = vmatpush1.bf16.msra.mxu0 %v369
        %394 = vmatprep.subr.bf16.mxu0 0
        %395 = vmatpush1.bf16.msra.mxu0 0
        %396 = vmatprep.subr.bf16.mxu0 0
        %397 = vmatpush1.bf16.msra.mxu0 0
        %398 = vmatprep.subr.bf16.mxu0 0
        %399 = vmatpush1.bf16.msra.mxu0 0
        %400 = vmatprep.subr.bf16.mxu0 0
        %401 = vmatpush1.bf16.msra.mxu0 0
        %402 = vmatprep.subr.bf16.mxu0 0
        %403 = vmatpush1.bf16.msra.mxu0 0
        %404 = vmatprep.subr.bf16.mxu0 0
        %405 = vmatpush1.bf16.msra.mxu0 0
        %406 = vmatprep.subr.bf16.mxu0 0
        %407 = vmatpush1.bf16.msra.mxu0 0
        %408 = vmatprep.subr.bf16.mxu0 0
        %409 = vmatpush1.bf16.msra.mxu0 0
        %410 = vmatprep.mubr.bf16.mxu0 0
        %411 = vmatmul.mubr.bf16.gmra.mrb[0].mxu0 %v322
        %v412 = vpop.f32.mrb[0].mxu0
        %v413 = vadd.f32 %v304, %v412
        %v414 = vpop.f32.mrb[0].mxu0
        %v415 = vpop.f32.mrb[0].mxu0
        %v416 = vadd.f32 %v304, %v415
        %v417 = vpop.f32.mrb[0].mxu0
        %418 = vmatprep.mubr.bf16.mxu0 0
        %419 = vmatmul.mubr.bf16.gmra.mrb[0].mxu0 %v323
        %v420 = vpop.f32.mrb[0].mxu0
        %v421 = vadd.f32 %v304, %v420
        %v422 = vpop.f32.mrb[0].mxu0
        %v423 = vpop.f32.mrb[0].mxu0
        %v424 = vadd.f32 %v304, %v423
        %v425 = vpop.f32.mrb[0].mxu0
        %426 = vmatprep.mubr.bf16.mxu0 0
        %427 = vmatmul.mubr.bf16.gmra.mrb[0].mxu0 %v324
        %v428 = vpop.f32.mrb[0].mxu0
        %v429 = vadd.f32 %v304, %v428
        %v430 = vpop.f32.mrb[0].mxu0
        %v431 = vpop.f32.mrb[0].mxu0
        %v432 = vadd.f32 %v304, %v431
        %v433 = vpop.f32.mrb[0].mxu0
        %434 = vmatprep.mubr.bf16.mxu0 0
        %435 = vmatmul.mubr.bf16.gmra.mrb[0].mxu0 %v325
        %v436 = vpop.f32.mrb[0].mxu0
        %v437 = vadd.f32 %v304, %v436
        %v438 = vpop.f32.mrb[0].mxu0
        %v439 = vpop.f32.mrb[0].mxu0
        %v440 = vadd.f32 %v304, %v439
        %v441 = vpop.f32.mrb[0].mxu0
        %442 = vdwg.mxu0
        %v443 = vmul.f32 %v413, %v413
        %v444 = vmul.f32 %v416, %v416
        %v445 = vmul.f32 %v421, %v421
        %v446 = vmul.f32 %v424, %v424
        %v447 = vmul.f32 %v429, %v429
        %v448 = vmul.f32 %v432, %v432
        %v449 = vmul.f32 %v437, %v437
        %v450 = vmul.f32 %v440, %v440
        %v451 = vmul.f32 %v413, %v443
        %v452 = vmul.f32 %v416, %v444
        %v453 = vmul.f32 %v421, %v445
        %v454 = vmul.f32 %v424, %v446
        %v455 = vmul.f32 %v429, %v447
        %v456 = vmul.f32 %v432, %v448
        %v457 = vmul.f32 %v437, %v449
        %v458 = vmul.f32 %v440, %v450
        %v459 = vmul.f32 %v451, 0.044715
        %v460 = vmul.f32 %v452, 0.044715
        %v461 = vmul.f32 %v453, 0.044715
        %v462 = vmul.f32 %v454, 0.044715
        %v463 = vmul.f32 %v455, 0.044715
        %v464 = vmul.f32 %v456, 0.044715
        %v465 = vmul.f32 %v457, 0.044715
        %v466 = vmul.f32 %v458, 0.044715
        %v467 = vadd.f32 %v413, %v459
        %v468 = vadd.f32 %v416, %v460
        %v469 = vadd.f32 %v421, %v461
        %v470 = vadd.f32 %v424, %v462
        %v471 = vadd.f32 %v429, %v463
        %v472 = vadd.f32 %v432, %v464
        %v473 = vadd.f32 %v437, %v465
        %v474 = vadd.f32 %v440, %v466
        %v475 = vmul.f32 %v467, 0.7978846
        %v476 = vmul.f32 %v468, 0.7978846
        %v477 = vmul.f32 %v469, 0.7978846
        %v478 = vmul.f32 %v470, 0.7978846
        %v479 = vmul.f32 %v471, 0.7978846
        %v480 = vmul.f32 %v472, 0.7978846
        %v481 = vmul.f32 %v473, 0.7978846
        %v482 = vmul.f32 %v474, 0.7978846
        %v483 = vtanh.pop %v475
        %v484 = vtanh.pop %v476
        %v485 = vtanh.pop %v477
        %v486 = vtanh.pop %v478
        %v487 = vtanh.pop %v479
        %v488 = vtanh.pop %v480
        %v489 = vtanh.pop %v481
        %v490 = vtanh.pop %v482
        %v491 = vadd.f32 %v483, 1.0
        %v492 = vadd.f32 %v484, 1.0
        %v493 = vadd.f32 %v485, 1.0
        %v494 = vadd.f32 %v486, 1.0
        %v495 = vadd.f32 %v487, 1.0
        %v496 = vadd.f32 %v488, 1.0
        %v497 = vadd.f32 %v489, 1.0
        %v498 = vadd.f32 %v490, 1.0
        %v499 = vmul.f32 %v491, 0.5
        %v500 = vmul.f32 %v492, 0.5
        %v501 = vmul.f32 %v493, 0.5
        %v502 = vmul.f32 %v494, 0.5
        %v503 = vmul.f32 %v495, 0.5
        %v504 = vmul.f32 %v496, 0.5
        %v505 = vmul.f32 %v497, 0.5
        %v506 = vmul.f32 %v498, 0.5
        %v507 = vmul.f32 %v413, %v499
        %v508 = vmul.f32 %v416, %v500
        %v509 = vmul.f32 %v421, %v501
        %v510 = vmul.f32 %v424, %v502
        %v511 = vmul.f32 %v429, %v503
        %v512 = vmul.f32 %v432, %v504
        %v513 = vmul.f32 %v437, %v505
        %v514 = vmul.f32 %v440, %v506
        %v515 = vpack.c.bf16 %v508, %v507
        %v516 = vpack.c.bf16 %v510, %v509
        %v517 = vpack.c.bf16 %v512, %v511
        %v518 = vpack.c.bf16 %v514, %v513
        %v519 = vld [vmem:[#allocation7] sm:$0xf]
        %v520 = vld [vmem:[#allocation7 + $0x4] sm:$0xf]
        %v521 = vld [vmem:[#allocation7 + $0x8] sm:$0xf]
        %v522 = vld [vmem:[#allocation7 + $0xc] sm:$0xf]
        %v523 = vld [vmem:[#allocation7 + $0x10] sm:$0xf]
        %v524 = vld [vmem:[#allocation7 + $0x14] sm:$0xf]
        %v525 = vld [vmem:[#allocation7 + $0x18] sm:$0xf]
        %v526 = vld [vmem:[#allocation7 + $0x1c] sm:$0xf]
        %v527 = vld [vmem:[#allocation7 + $0x20] sm:$0xf]
        %v528 = vld [vmem:[#allocation7 + $0x24] sm:$0xf]
        %v529 = vld [vmem:[#allocation7 + $0x28] sm:$0xf]
        %v530 = vld [vmem:[#allocation7 + $0x2c] sm:$0xf]
        %v531 = vld [vmem:[#allocation7 + $0x30] sm:$0xf]
        %v532 = vld [vmem:[#allocation7 + $0x34] sm:$0xf]
        %v533 = vld [vmem:[#allocation7 + $0x38] sm:$0xf]
        %v534 = vld [vmem:[#allocation7 + $0x3c] sm:$0xf]
        %v535 = vld [vmem:[%s4] sm:$0x1]
        %v537 = vlaneseq
        %v538 = vshrl.u32 %v537, 7
        %v539 = vsub.s32 0, %v538
        %v540 = vrot.slane %v535, %v539
        %v558 = vunpack.c.l.b16 %v519
        %v559 = vunpack.c.l.b16 %v520
        %v560 = vunpack.c.l.b16 %v521
        %v561 = vunpack.c.l.b16 %v522
        %v562 = vunpack.c.l.b16 %v523
        %v563 = vunpack.c.l.b16 %v524
        %v564 = vunpack.c.l.b16 %v525
        %v565 = vunpack.c.l.b16 %v526
        %v566 = vunpack.c.l.b16 %v527
        %v567 = vunpack.c.l.b16 %v528
        %v568 = vunpack.c.l.b16 %v529
        %v569 = vunpack.c.l.b16 %v530
        %v570 = vunpack.c.l.b16 %v531
        %v571 = vunpack.c.l.b16 %v532
        %v572 = vunpack.c.l.b16 %v533
        %v573 = vunpack.c.l.b16 %v534
        %v574 = vpack.c.b16 %v559, %v558
        %v575 = vpack.c.b16 %v561, %v560
        %v576 = vpack.c.b16 %v563, %v562
        %v577 = vpack.c.b16 %v565, %v564
        %v578 = vpack.c.b16 %v567, %v566
        %v579 = vpack.c.b16 %v569, %v568
        %v580 = vpack.c.b16 %v571, %v570
        %v581 = vpack.c.b16 %v573, %v572
        %590 = vmatprep.subr.bf16.mxu0 0
        %591 = vmatpush1.bf16.msra.mxu0 %v574
        %592 = vmatprep.subr.bf16.mxu0 0
        %593 = vmatpush1.bf16.msra.mxu0 %v575
        %594 = vmatprep.subr.bf16.mxu0 0
        %595 = vmatpush1.bf16.msra.mxu0 %v576
        %596 = vmatprep.subr.bf16.mxu0 0
        %597 = vmatpush1.bf16.msra.mxu0 %v577
        %598 = vmatprep.subr.bf16.mxu0 0
        %599 = vmatpush1.bf16.msra.mxu0 %v578
        %600 = vmatprep.subr.bf16.mxu0 0
        %601 = vmatpush1.bf16.msra.mxu0 %v579
        %602 = vmatprep.subr.bf16.mxu0 0
        %603 = vmatpush1.bf16.msra.mxu0 %v580
        %604 = vmatprep.subr.bf16.mxu0 0
        %605 = vmatpush1.bf16.msra.mxu0 %v581
        %606 = vmatprep.subr.bf16.mxu0 0
        %607 = vmatpush1.bf16.msra.mxu0 0
        %608 = vmatprep.subr.bf16.mxu0 0
        %609 = vmatpush1.bf16.msra.mxu0 0
        %610 = vmatprep.subr.bf16.mxu0 0
        %611 = vmatpush1.bf16.msra.mxu0 0
        %612 = vmatprep.subr.bf16.mxu0 0
        %613 = vmatpush1.bf16.msra.mxu0 0
        %614 = vmatprep.subr.bf16.mxu0 0
        %615 = vmatpush1.bf16.msra.mxu0 0
        %616 = vmatprep.subr.bf16.mxu0 0
        %617 = vmatpush1.bf16.msra.mxu0 0
        %618 = vmatprep.subr.bf16.mxu0 0
        %619 = vmatpush1.bf16.msra.mxu0 0
        %620 = vmatprep.subr.bf16.mxu0 0
        %621 = vmatpush1.bf16.msra.mxu0 0
        %622 = vmatprep.mubr.bf16.mxu0 0
        %623 = vmatmul.mubr.bf16.gmra.mrb[0].mxu0 %v515
        %v624 = vpop.f32.mrb[0].mxu0
        %v625 = vadd.f32 %v540, %v624
        %v626 = vpop.f32.mrb[0].mxu0
        %v627 = vpop.f32.mrb[0].mxu0
        %v628 = vadd.f32 %v540, %v627
        %v629 = vpop.f32.mrb[0].mxu0
        %630 = vmatprep.mubr.bf16.mxu0 0
        %631 = vmatmul.mubr.bf16.gmra.mrb[0].mxu0 %v516
        %v632 = vpop.f32.mrb[0].mxu0
        %v633 = vadd.f32 %v540, %v632
        %v634 = vpop.f32.mrb[0].mxu0
        %v635 = vpop.f32.mrb[0].mxu0
        %v636 = vadd.f32 %v540, %v635
        %v637 = vpop.f32.mrb[0].mxu0
        %638 = vmatprep.mubr.bf16.mxu0 0
        %639 = vmatmul.mubr.bf16.gmra.mrb[0].mxu0 %v517
        %v640 = vpop.f32.mrb[0].mxu0
        %v641 = vadd.f32 %v540, %v640
        %v642 = vpop.f32.mrb[0].mxu0
        %v643 = vpop.f32.mrb[0].mxu0
        %v644 = vadd.f32 %v540, %v643
        %v645 = vpop.f32.mrb[0].mxu0
        %646 = vmatprep.mubr.bf16.mxu0 0
        %647 = vmatmul.mubr.bf16.gmra.mrb[0].mxu0 %v518
        %v648 = vpop.f32.mrb[0].mxu0
        %v649 = vadd.f32 %v540, %v648
        %v650 = vpop.f32.mrb[0].mxu0
        %v651 = vpop.f32.mrb[0].mxu0
        %v652 = vadd.f32 %v540, %v651
        %v653 = vpop.f32.mrb[0].mxu0
        %654 = vdwg.mxu0
        %655 = vst [vmem:[%s271] sm:$0xff] %v625
        %656 = vst [vmem:[%s271 + $0x8] sm:$0xff] %v628
        %657 = vst [vmem:[%s271 + $0x10] sm:$0xff] %v633
        %658 = vst [vmem:[%s271 + $0x18] sm:$0xff] %v636
        %659 = vst [vmem:[%s271 + $0x20] sm:$0xff] %v641
        %660 = vst [vmem:[%s271 + $0x28] sm:$0xff] %v644
        %661 = vst [vmem:[%s271 + $0x30] sm:$0xff] %v649
        %662 = vst [vmem:[%s271 + $0x38] sm:$0xff] %v652
        %s663 = sand.u32 %s141, 1
        %s664 = scalar_lea.sflag [#allocation4], %s663
        %s665 = sand.u32 %s141, 1
        %s666 = smul.addr %s665, 64
        %s667 = scalar_lea.vmem [#allocation8], %s666
        // Predicated region
        $region53: #{tpu_custom_call.1} parent=39 // pred_check
          %p668 = pneg %p151
        $region54: #{tpu_custom_call.1} parent=39 // pred_check_branch
          %670 = sbr.rel (%p668) target = $region56
        $region55: #{tpu_custom_call.1} parent=39 // pred_region
          %s671 = smul.u32 8, %s23
          %s673 = ssub.s32 1024, 1024
          %674 = vsyncadd %s664, %s673
          %s675 = smul.addr %s671, 128
          %s676 = scalar_lea.hbm %s5, %s675
          %s677 = sshll.u32 %s667, 4
          %s678 = int_to_ptr.vmem [resolvable:$true] %s677
          %683 = dma.vmem_to_hbm [thread:$0]  %s678, 1024, %s676, %s664, 128, 128, 8
        $region56: #{tpu_custom_call.1} parent=39 // pred_fallthru
          _
      $region40: #{tpu_custom_call.1} parent=5 // pred_fallthru
        _
      %p684 = scmp.le.s32.totalorder 2, %s18
      // Predicated region
      $region57: #{tpu_custom_call.1} parent=5 // pred_check
        %p685 = pneg %p684
      $region58: #{tpu_custom_call.1} parent=5 // pred_check_branch
        %687 = sbr.rel (%p685) target = $region60
      $region59: #{tpu_custom_call.1} parent=5 // pred_region
        %s688 = ssub.s32 %s18, 2
        // Predicated region
        $region61: #{tpu_custom_call.1} parent=59 // pred_check
          %p689 = pneg %p157
        $region62: #{tpu_custom_call.1} parent=59 // pred_check_branch
          %691 = sbr.rel (%p689) target = $region64
        $region63: #{tpu_custom_call.1} parent=59 // pred_region
          %s692 = sand.u32 %s142, 1
          %s693 = scalar_lea.sflag [#allocation4], %s692
          %s694 = sand.u32 %s142, 1
          %s695 = smul.addr %s694, 64
          %s696 = scalar_lea.vmem [#allocation8], %s695
          %697 = dma.done %s693, 1024
        $region64: #{tpu_custom_call.1} parent=59 // pred_fallthru
          _
      $region60: #{tpu_custom_call.1} parent=5 // pred_fallthru
        _
    $region6: #{tpu_custom_call.1} parent=1 // loop_footer
      %s22 = sadd.s32 1, %s18
    $region7: #{tpu_custom_call.1} parent=1 // loop_footer_branch
      %17 = sbr.rel target = $region3
    $region8: #{tpu_custom_call.1} parent=1 // loop_exit
      _
    %698 = vsyncpa [#allocation3], 1
    %s699 = scalar_lea.sflag [#allocation3], 1
    %700 = vsyncpa %s699, 1
    %701 = vsyncpa [#allocation6], 1
    %702 = vsyncpa [#allocation4], 1
    %s703 = scalar_lea.sflag [#allocation4], 1
    %704 = vsyncpa %s703, 1

</llo_original>
